<compile_context>
chip_gen: v7x
topology: tpu7x:2x2x1
jax: 0.10.0
libtpu: 0.0.40
codegen_flags: <defaults>
</compile_context>

<pallas_src>
import functools

import jax
import jax.numpy as jnp
from jax.experimental import pallas as pl
from jax.experimental.pallas import tpu as pltpu

EPS = 1e-8
_LANE = 128


def _sum_sigmoid_kernel(x_ref, out_ref, *scratch, nf, tn, nj):
    """Per-(folded-)row sum of sigmoid(x), streamed over the spatial axis."""
    x = x_ref[...]
    # bf16 inputs: keep the sigmoid math in bf16; accumulate partial sums in f32.
    xc = x if x.dtype == jnp.bfloat16 else x.astype(jnp.float32)
    s = 0.5 * (jnp.tanh(0.5 * xc) + 1.0)          # sigmoid as a single tanh EUP push

    if nj == 1:
        # Fast path: one spatial tile per row tile (tn == full folded row).
        # No accumulator, no init/finalize, no masking.
        out_ref[...] = jnp.sum(s.astype(jnp.float32), axis=-1, keepdims=True)
        return

    acc_ref, = scratch                             # (tm, 128) f32, lane-dense
    j = pl.program_id(1)
    last = nj - 1                                  # static Python int

    @pl.when(j == 0)
    def _():
        acc_ref[...] = jnp.zeros_like(acc_ref)

    def lane_fold(v):
        # (tm, tn) -> (tm, 128) using only lane-aligned static slices + adds
        # (no XLU, no reshape); upcast to f32 at the accumulate.
        out = v[:, 0:_LANE].astype(jnp.float32)
        for k in range(1, tn // _LANE):
            out = out + v[:, k * _LANE:(k + 1) * _LANE].astype(jnp.float32)
        return out

    if nf % tn != 0:
        # Mask ONLY the single ragged tile; every other tile takes the clean path.
        @pl.when(j < last)
        def _():
            acc_ref[...] += lane_fold(s)

        @pl.when(j == last)
        def _():
            col = last * tn + jax.lax.broadcasted_iota(jnp.int32, s.shape, 1)
            acc_ref[...] += lane_fold(jnp.where(col < nf, s, jnp.zeros_like(s)))
    else:
        acc_ref[...] += lane_fold(s)

    @pl.when(j == last)
    def _():
        # One cross-lane (XLU) reduce and one narrow store per row tile.
        out_ref[...] = jnp.sum(acc_ref[...], axis=-1, keepdims=True)


def _plan(rows, n, itemsize):
    """Choose the spatial fold S, tile sizes and grid. All static (trace-time)."""
    sub = {4: 8, 2: 16, 1: 32}.get(itemsize, 8)    # dtype-packed sublane multiple
    nf_cap = (32 * 1024) // itemsize               # folded row <= 32 KiB
    nf_min = 512                                   # never fold into silly-narrow rows
    target_bytes = 4 * 1024 * 1024                 # ~4 MiB input blocks

    # Divisors of n = h*w (trace-time trial division; n is modest).
    divs = set()
    d = 1
    while d * d <= n:
        if n % d == 0:
            divs.add(d)
            divs.add(n // d)
        d += 1

    # Pick the fold n -> (S, nf = n//S): prefer (a) enough folded rows for >= 2
    # row tiles (v7x megacore), then (b) 128-aligned folded rows, then (c) bigger.
    best = None
    for nf in sorted(divs):
        if nf > nf_cap or (nf < nf_min and nf != n):
            continue
        S = n // nf
        key = (rows * S >= 2 * sub, nf % _LANE == 0, nf)
        if best is None or key > best[0]:
            best = (key, nf)

    if best is not None:
        nf = best[1]
        S = n // nf
        tn, nj = nf, 1                              # single spatial tile -> no j axis work
    else:
        # Huge, awkwardly-factored n: keep a spatial grid axis; only the final
        # ragged tile is masked inside the kernel.
        S, nf = 1, n
        tn = nf_cap                                 # multiple of 128 by construction
        nj = pl.cdiv(n, tn)

    rows_f = rows * S
    if rows_f <= sub:
        tm = rows_f                                 # full-dim exemption
    else:
        tm_target = max(sub, (target_bytes // (tn * itemsize)) // sub * sub)
        tm_split = pl.cdiv(pl.cdiv(rows_f, 2), sub) * sub   # allow >= 2 row tiles
        tm_rows = (rows_f // sub) * sub
        tm = max(sub, min(tm_target, tm_split, tm_rows))
    grid_rows = pl.cdiv(rows_f, tm)
    return S, nf, rows_f, tm, tn, nj, grid_rows


@jax.jit
def kl_loss(x, y, fg):
    """Pallas implementation of KLLoss.forward(x, y, fg). Returns a scalar."""
    b, c, h, w = x.shape
    n = h * w
    rows = b * c

    S, nf, rows_f, tm, tn, nj, grid_rows = _plan(rows, n, x.dtype.itemsize)
    x2 = x.reshape(rows_f, nf)                      # contiguous; native dtype on the wire
    rows_pad = grid_rows * tm

    scratch = [] if nj == 1 else [pltpu.VMEM((tm, _LANE), jnp.float32)]

    row_sums = pl.pallas_call(
        functools.partial(_sum_sigmoid_kernel, nf=nf, tn=tn, nj=nj),
        out_shape=jax.ShapeDtypeStruct((rows_pad, 1), jnp.float32),
        grid_spec=pltpu.PrefetchScalarGridSpec(
            num_scalar_prefetch=0,
            grid=(grid_rows, nj),
            in_specs=[pl.BlockSpec((tm, tn), lambda r, j: (r, j))],
            out_specs=pl.BlockSpec((tm, 1), lambda r, j: (r, 0)),
            scratch_shapes=scratch,
        ),
        compiler_params=pltpu.CompilerParams(
            dimension_semantics=("parallel", "arbitrary"),   # rows shard across v7x TCs
            vmem_limit_bytes=32 * 1024 * 1024,               # safe on v5e/v6e/v7x
        ),
    )(x2)

    # Undo the spatial fold, then the tiny per-(b, c) epilogue in plain JAX.
    per_row = row_sums[:rows_f, 0]
    per_bc = per_row.reshape(rows, S).sum(axis=-1) if S > 1 else per_row
    m_pos = (per_bc / jnp.float32(n)).reshape(b, c)
    m_neg = 1.0 - m_pos

    y32 = y.astype(jnp.float32)
    fg32 = fg.astype(jnp.float32)
    bg32 = 1.0 - fg32
    kl_pos = m_pos * jnp.log(jnp.maximum(m_pos / (fg32 + 1e-10), EPS))
    kl_neg = m_neg * jnp.log(jnp.maximum(m_neg / (bg32 + 1e-10), EPS))
    kl = y32 * (kl_pos + kl_neg)
    return jnp.sum(kl) / jnp.sum(y32)


def _kl_loss_ref(x, y, fg):
    """Pure-JAX reference mirroring the PyTorch code literally."""
    b, c, h, w = x.shape
    xs = jax.nn.sigmoid(x.reshape(b, c, h * w).astype(jnp.float32))
    prob = jnp.stack([1.0 - xs, xs], axis=2)                  # (b, c, 2, N)
    marginal = jnp.mean(prob, axis=3)                         # (b, c, 2)
    y_ = jnp.stack([y, y], axis=2).astype(jnp.float32)
    fb = jnp.stack([1.0 - fg, fg], axis=2).astype(jnp.float32)
    kl = (y_ * marginal * jnp.log(jnp.maximum(marginal / (fb + 1e-10), EPS))).sum(2)
    return jnp.sum(kl) / jnp.sum(y.astype(jnp.float32))


def _check(x, y, fg, rtol, atol):
    out = jax.block_until_ready(kl_loss(x, y, fg))
    ref = jax.block_until_ready(_kl_loss_ref(x, y, fg))
    assert jnp.allclose(out, ref, rtol=rtol, atol=atol), (out, ref)
    return out


if __name__ == "__main__":
    key = jax.random.PRNGKey(0)
    kx, ky, kf = jax.random.split(key, 3)

    # 1) Small shape consistent with the module (fold path, single spatial tile,
    #    two row tiles).
    b, c, h, w = 2, 4, 16, 16
    x = jax.random.normal(kx, (b, c, h, w), dtype=jnp.float32)
    y = jax.random.uniform(ky, (b, c), dtype=jnp.float32, minval=0.1, maxval=1.0)
    fg = jax.random.uniform(kf, (b, c), dtype=jnp.float32, minval=0.05, maxval=0.95)
    _check(x, y, fg, rtol=1e-4, atol=1e-5)

    # 2) Non-power-of-two spatial extent (fold picks a 128-aligned divisor; no masking).
    b2, c2, h2, w2 = 2, 4, 64, 48
    x2 = jax.random.normal(kx, (b2, c2, h2, w2), dtype=jnp.float32)
    y2 = jax.random.uniform(ky, (b2, c2), dtype=jnp.float32, minval=0.1, maxval=1.0)
    fg2 = jax.random.uniform(kf, (b2, c2), dtype=jnp.float32, minval=0.05, maxval=0.95)
    _check(x2, y2, fg2, rtol=1e-4, atol=1e-5)

    # 3) bf16 input stays bf16 on the wire AND through the tanh (f32 accumulation only).
    _check(x2.astype(jnp.bfloat16), y2, fg2, rtol=1e-2, atol=1e-3)

    # 4) Prime spatial extent > 8192: exercises the spatial-grid fallback with the
    #    lane-dense f32 accumulator and last-tile-only masking.
    b3, c3, h3, w3 = 2, 4, 1, 9973
    x3 = jax.random.normal(kx, (b3, c3, h3, w3), dtype=jnp.float32)
    y3 = jax.random.uniform(ky, (b3, c3), dtype=jnp.float32, minval=0.1, maxval=1.0)
    fg3 = jax.random.uniform(kf, (b3, c3), dtype=jnp.float32, minval=0.05, maxval=0.95)
    _check(x3, y3, fg3, rtol=1e-4, atol=1e-5)

    print("KERNEL_OK")
</pallas_src>

<mosaic_0001>
module attributes {stable_mosaic.version = 11 : i64} {
  func.func @_sum_sigmoid_kernel(%arg0: i32, %arg1: i32, %arg2: memref<8x256xf32, #tpu.memory_space<vmem>>, %arg3: memref<8x1xf32, #tpu.memory_space<vmem>>) attributes {dimension_semantics = [#tpu.dimension_semantics<parallel>, #tpu.dimension_semantics<arbitrary>], iteration_bounds = array<i64: 1, 1>, scalar_prefetch = 0 : i64, scratch_operands = 0 : i64, tpu.core_type = #tpu.core_type<tc>, window_params = [{transform_indices = @transform_0, window_bounds = array<i64: 8, 256>}, {transform_indices = @transform_1, window_bounds = array<i64: 8, 1>}]} {
    %c0 = arith.constant 0 : index
    %c0_0 = arith.constant 0 : index
    %0 = vector.load %arg2[%c0, %c0_0] : memref<8x256xf32, #tpu.memory_space<vmem>>, vector<8x256xf32>
    %cst = arith.constant 5.000000e-01 : f32
    %1 = vector.broadcast %cst : f32 to vector<8x256xf32>
    %2 = arith.mulf %1, %0 : vector<8x256xf32>
    %3 = math.tanh %2 : vector<8x256xf32>
    %cst_1 = arith.constant 1.000000e+00 : f32
    %4 = vector.broadcast %cst_1 : f32 to vector<8x256xf32>
    %5 = arith.addf %3, %4 : vector<8x256xf32>
    %cst_2 = arith.constant 5.000000e-01 : f32
    %6 = vector.broadcast %cst_2 : f32 to vector<8x256xf32>
    %7 = arith.mulf %6, %5 : vector<8x256xf32>
    %cst_3 = arith.constant dense<0.000000e+00> : vector<8xf32>
    %8 = vector.multi_reduction <add>, %7, %cst_3 [1] : vector<8x256xf32> to vector<8xf32>
    %9 = vector.shape_cast %8 : vector<8xf32> to vector<8x1xf32>
    %c0_4 = arith.constant 0 : index
    %c0_5 = arith.constant 0 : index
    %10 = vector.load %arg3[%c0_4, %c0_5] : memref<8x1xf32, #tpu.memory_space<vmem>>, vector<8x1xf32>
    tpu.vector_store %arg3[%c0_4, %c0_5], %9 {strides = array<i32>} : memref<8x1xf32, #tpu.memory_space<vmem>>, vector<8x1xf32>,
    return
  }
  func.func @transform_0(%arg0: i32, %arg1: i32) -> (i32, i32) {
    %c0_i32 = arith.constant 0 : i32
    return %arg0, %arg1 : i32, i32
  }
  func.func @transform_1(%arg0: i32, %arg1: i32) -> (i32, i32) {
    %c0_i32 = arith.constant 0 : i32
    %c0_i32_0 = arith.constant 0 : i32
    return %arg0, %c0_i32 : i32, i32
  }
}

</mosaic_0001>

<llo_original>
// kernel: kl_loss.1
$region0: #{kl_loss.1}
  #allocation0 [shape = 'u32[]', space=smem, size = 0x4, offset = 0x4, fixed_abs, tag = 'smem constant byte address 0x4 - core index']
  #allocation1 [shape = 'u32[144,128]{1,0:T(1,128)}', space=vmem, size = 0x12000, scoped, tag = 'internal scratch']
  %s0 = inlined_call_operand.vmem [shape: f32[8,256], index: 0, kind: input, shape index: {}]
  %s1 = inlined_call_operand.vmem [shape: f32[8,1], index: 1, kind: output, shape index: {}]
  %s2 = sld [smem:[#allocation0]]
  $region14: #{kl_loss.1} parent=0
    _
  %s4 = ssub.s32 1, %s2
  %s5 = scalar_select 0, %s4, %s2
  // Predicated region
  $region2: #{kl_loss.1} parent=0 // pred_check
    _
  $region3: #{kl_loss.1} parent=0 // pred_check_branch
    %7 = sbr.rel (0) target = $region5
  $region4: #{kl_loss.1} parent=0 // pred_region
    _
  $region5: #{kl_loss.1} parent=0 // pred_fallthru
    _
  %v8 = vld [vmem:[%s0] sm:$0xff]
  %v9 = vld [vmem:[%s0 + $0x8] sm:$0xff]
  %v10 = vmul.f32 %v8, 0.5
  %v11 = vmul.f32 %v9, 0.5
  %v12 = vtanh.pop %v10
  %v13 = vtanh.pop %v11
  %v14 = vadd.f32 %v12, 1.0
  %v15 = vadd.f32 %v13, 1.0
  %v16 = vmul.f32 %v14, 0.5
  %v17 = vmul.f32 %v15, 0.5
  %v18 = vadd.f32 %v16, %v17
  %19 = vadd.xlane.f32.xlu0 %v18
  %v20 = vpop.xlane.xlu0 %19
  %vm21 = vcmask 7168
  %22 = vst.msk [vmem:[%s1] sm:$0xff] %vm21, %v20
  // Predicated region
  $region6: #{kl_loss.1} parent=0 // pred_check
    _
  $region7: #{kl_loss.1} parent=0 // pred_check_branch
    %24 = sbr.rel (0) target = $region9
  $region8: #{kl_loss.1} parent=0 // pred_region
    _
  $region9: #{kl_loss.1} parent=0 // pred_fallthru
    _
  // Predicated region
  $region10: #{kl_loss.1} parent=0 // pred_check
    _
  $region11: #{kl_loss.1} parent=0 // pred_check_branch
    %26 = sbr.rel (0) target = $region13
  $region12: #{kl_loss.1} parent=0 // pred_region
    _
  $region13: #{kl_loss.1} parent=0 // pred_fallthru
    _

</llo_original>
